<compile_context>
chip_gen: v5e
topology: v5e:2x2
jax: 0.10.0
libtpu: 0.0.40
codegen_flags: <defaults>
</compile_context>

<pallas_src>
import jax
import jax.numpy as jnp
from jax.experimental import pallas as pl
from jax.experimental.pallas import tpu as pltpu


def _pick_tile(dim, preferred, align):
    """Largest tile <= preferred that divides dim and is a multiple of align;
    falls back to the full dim (always valid for BlockSpec)."""
    if dim <= preferred or dim % align != 0:
        return dim
    t = min(preferred, dim)
    t -= t % align
    while t >= align:
        if dim % t == 0:
            return t
        t -= align
    return dim


def _logreg_kernel(ids_ref, table_ref, w_ref, b_ref, out_ref, maxacc_ref):
    # ids_ref:   (B_t, S_t) int32 token ids                  (streamed)
    # table_ref: (V, E)     bf16 embedding table             (VMEM-resident)
    # w_ref:     (E, O_PAD) f32 Linear weight (pre-transposed, lane-padded)
    # b_ref:     (1, O_PAD) f32 Linear bias (lane-padded)
    # out_ref:   (B_t, O_PAD) f32 output block (resident across seq axis)
    # maxacc_ref:(B_t, E)   f32 running max-pool accumulator (scratch)
    s = pl.program_id(1)

    @pl.when(s == 0)
    def _init():
        maxacc_ref[...] = jnp.full_like(maxacc_ref, -jnp.inf)

    ids = ids_ref[...]                                   # (B_t, S_t) int32
    b_t, s_t = ids.shape
    v, e = table_ref.shape

    # Fused embedding gather as a one-hot matmul on the MXU:
    #   one_hot[b, s, v] = (ids[b, s] == v)
    #   emb[b, s, :]     = one_hot[b, s, :] @ table    (exact row select)
    vocab_iota = jax.lax.broadcasted_iota(jnp.int32, (b_t, s_t, v), 2)
    one_hot = (ids[:, :, None] == vocab_iota).astype(table_ref.dtype)
    emb = jnp.dot(one_hot.reshape(b_t * s_t, v), table_ref[...],
                  preferred_element_type=jnp.float32)    # (B_t*S_t, E) f32
    emb = emb.reshape(b_t, s_t, e)

    # Max-pool over this seq tile, fold into running accumulator (f32).
    maxacc_ref[...] = jnp.maximum(maxacc_ref[...], jnp.max(emb, axis=1))

    @pl.when(s == pl.num_programs(1) - 1)
    def _finalize():
        pooled = maxacc_ref[...]                         # (B_t, E) f32
        logits = jnp.dot(pooled, w_ref[...],
                         preferred_element_type=jnp.float32) + b_ref[...]
        out_ref[...] = jax.nn.sigmoid(logits).astype(out_ref.dtype)


def logistic_regression_forward(x_ids, emb_table, lin_w, lin_b):
    """Forward pass.

    x_ids:     (B, S) int32 token ids
    emb_table: (vocab, E) f32 embedding weights (frozen, like the torch module)
    lin_w:     (O, E) f32 torch-layout Linear weight
    lin_b:     (O,)   f32 Linear bias
    returns:   (B, O) f32 sigmoid probabilities
    """
    B, S = x_ids.shape
    V, E = emb_table.shape
    O = lin_w.shape[0]
    O_PAD = 128                                    # lane-dense output stores

    # Stream the table in bf16 (gather via one-hot matmul is an exact row
    # select of the bf16 values); keep the projection weights in f32.
    table_bf16 = emb_table.astype(jnp.bfloat16)
    w_pad = jnp.zeros((E, O_PAD), jnp.float32).at[:, :O].set(lin_w.T)
    b_pad = jnp.zeros((1, O_PAD), jnp.float32).at[:, :O].set(lin_b)

    # Tile sizes: modest tiles that keep double-buffering alive even under the
    # smaller scoped-VMEM defaults (v5e 16 MiB / v7x 32 MiB scoped).
    B_t = _pick_tile(B, 256, 8)
    S_t = _pick_tile(S, 512, 128)
    grid = (B // B_t, S // S_t)

    flops = int(2 * B * S * V * E + 2 * B * E * O_PAD)
    bytes_accessed = int(B * S * 4 + V * E * 2 + E * O_PAD * 4
                         + O_PAD * 4 + B * O_PAD * 4)

    out_pad = pl.pallas_call(
        _logreg_kernel,
        out_shape=jax.ShapeDtypeStruct((B, O_PAD), jnp.float32),
        grid_spec=pltpu.PrefetchScalarGridSpec(
            num_scalar_prefetch=0,
            grid=grid,
            in_specs=[
                pl.BlockSpec((B_t, S_t), lambda i, s: (i, s)),   # token ids
                pl.BlockSpec((V, E),     lambda i, s: (0, 0)),   # table (resident)
                pl.BlockSpec((E, O_PAD), lambda i, s: (0, 0)),   # weight (resident)
                pl.BlockSpec((1, O_PAD), lambda i, s: (0, 0)),   # bias   (resident)
            ],
            out_specs=pl.BlockSpec((B_t, O_PAD), lambda i, s: (i, 0)),
            scratch_shapes=[pltpu.VMEM((B_t, E), jnp.float32)],  # max accumulator
        ),
        compiler_params=pltpu.CompilerParams(
            dimension_semantics=("parallel", "arbitrary")),
        cost_estimate=pl.CostEstimate(
            flops=flops,
            transcendentals=int(B * O_PAD),
            bytes_accessed=bytes_accessed),
    )(x_ids.astype(jnp.int32), table_bf16, w_pad, b_pad)

    return out_pad[:, :O]


if __name__ == "__main__":
    # Small, deterministic synthetic setup (mirrors module __init__ shapes).
    batch = 2
    seq_len = 8
    vocab_size = 32
    embedding_length = 32
    output_dim = 4

    key = jax.random.PRNGKey(0)
    k_emb, k_w, k_b, k_x = jax.random.split(key, 4)

    emb_table = jax.random.normal(k_emb, (vocab_size, embedding_length),
                                  dtype=jnp.float32)
    lin_w = jax.random.normal(k_w, (output_dim, embedding_length),
                              dtype=jnp.float32) * 0.1
    lin_b = jax.random.normal(k_b, (output_dim,), dtype=jnp.float32) * 0.1
    x_ids = jax.random.randint(k_x, (batch, seq_len), 0, vocab_size,
                               dtype=jnp.int32)

    out = logistic_regression_forward(x_ids, emb_table, lin_w, lin_b)
    out = jax.block_until_ready(out)

    # Pure-JAX reference (same math as the torch forward), with the embedding
    # table rounded to bf16 to match the kernel's bf16-streamed weights.
    emb_ref = emb_table.astype(jnp.bfloat16)[x_ids].astype(jnp.float32)
    ref = jax.nn.sigmoid(jnp.max(emb_ref, axis=1) @ lin_w.T + lin_b)

    assert out.shape == (batch, output_dim)
    assert jnp.allclose(out, ref, atol=2e-3, rtol=2e-3)

    print("KERNEL_OK")
</pallas_src>

<mosaic_0001>
module attributes {stable_mosaic.version = 11 : i64} {
  func.func @_logreg_kernel(%arg0: i32, %arg1: i32, %arg2: memref<2x8xi32, #tpu.memory_space<vmem>>, %arg3: memref<32x32xbf16, #tpu.memory_space<vmem>>, %arg4: memref<32x128xf32, #tpu.memory_space<vmem>>, %arg5: memref<1x128xf32, #tpu.memory_space<vmem>>, %arg6: memref<2x128xf32, #tpu.memory_space<vmem>>, %arg7: memref<2x32xf32, #tpu.memory_space<vmem>>) attributes {dimension_semantics = [#tpu.dimension_semantics<parallel>, #tpu.dimension_semantics<arbitrary>], iteration_bounds = array<i64: 1, 1>, scalar_prefetch = 0 : i64, scratch_operands = 1 : i64, tpu.core_type = #tpu.core_type<tc>, window_params = [{transform_indices = @transform_0, window_bounds = array<i64: 2, 8>}, {pipeline_mode = #tpu.pipeline_mode<synchronous>, transform_indices = @transform_1, window_bounds = array<i64: 32, 32>}, {pipeline_mode = #tpu.pipeline_mode<synchronous>, transform_indices = @transform_2, window_bounds = array<i64: 32, 128>}, {pipeline_mode = #tpu.pipeline_mode<synchronous>, transform_indices = @transform_3, window_bounds = array<i64: 1, 128>}, {transform_indices = @transform_4, window_bounds = array<i64: 2, 128>}]} {
    %c0_i32 = arith.constant 0 : i32
    %0 = arith.cmpi eq, %arg1, %c0_i32 : i32
    %1 = arith.extui %0 : i1 to i32
    %c0_i32_0 = arith.constant 0 : i32
    %2 = arith.cmpi ne, %1, %c0_i32_0 : i32
    scf.if %2 {
      %cst_11 = arith.constant 0xFF800000 : f32
      %22 = vector.broadcast %cst_11 : f32 to vector<2x32xf32>
      %c0_12 = arith.constant 0 : index
      %c0_13 = arith.constant 0 : index
      %23 = vector.load %arg7[%c0_12, %c0_13] : memref<2x32xf32, #tpu.memory_space<vmem>>, vector<2x32xf32>
      tpu.vector_store %arg7[%c0_12, %c0_13], %22 {strides = array<i32>} : memref<2x32xf32, #tpu.memory_space<vmem>>, vector<2x32xf32>,
    } else {
    }
    %c0 = arith.constant 0 : index
    %c0_1 = arith.constant 0 : index
    %3 = vector.load %arg2[%c0, %c0_1] : memref<2x8xi32, #tpu.memory_space<vmem>>, vector<2x8xi32>
    %4 = tpu.iota {dimensions = array<i32: 2>} : vector<2x8x32xi32>
    %5 = vector.shape_cast %3 : vector<2x8xi32> to vector<2x8x1xi32>
    %6 = vector.broadcast %5 : vector<2x8x1xi32> to vector<2x8x32xi32>
    %7 = arith.cmpi eq, %6, %4 : vector<2x8x32xi32>
    %8 = arith.extui %7 : vector<2x8x32xi1> to vector<2x8x32xi32>
    %9 = arith.sitofp %8 : vector<2x8x32xi32> to vector<2x8x32xf32>
    %10 = arith.truncf %9 : vector<2x8x32xf32> to vector<2x8x32xbf16>
    %11 = vector.shape_cast %10 : vector<2x8x32xbf16> to vector<16x32xbf16>
    %c0_2 = arith.constant 0 : index
    %c0_3 = arith.constant 0 : index
    %12 = vector.load %arg3[%c0_2, %c0_3] : memref<32x32xbf16, #tpu.memory_space<vmem>>, vector<32x32xbf16>
    %cst = arith.constant dense<0.000000e+00> : vector<16x32xf32>
    %13 = tpu.matmul %11, %12, %cst {dimension_numbers = #tpu.dot_dimension_numbers<[1], [0], [0], [1], [0, 0, 1, 1], [], []>} : vector<16x32xbf16>, vector<32x32xbf16>, vector<16x32xf32> -> vector<16x32xf32>
    %14 = vector.shape_cast %13 : vector<16x32xf32> to vector<2x8x32xf32>
    %c0_4 = arith.constant 0 : index
    %c0_5 = arith.constant 0 : index
    %15 = vector.load %arg7[%c0_4, %c0_5] : memref<2x32xf32, #tpu.memory_space<vmem>>, vector<2x32xf32>
    %cst_6 = arith.constant dense<0xFF800000> : vector<2x32xf32>
    %16 = vector.multi_reduction <maximumf>, %14, %cst_6 [1] : vector<2x8x32xf32> to vector<2x32xf32>
    %17 = arith.maximumf %15, %16 : vector<2x32xf32>
    %c0_7 = arith.constant 0 : index
    %c0_8 = arith.constant 0 : index
    %18 = vector.load %arg7[%c0_7, %c0_8] : memref<2x32xf32, #tpu.memory_space<vmem>>, vector<2x32xf32>
    tpu.vector_store %arg7[%c0_7, %c0_8], %17 {strides = array<i32>} : memref<2x32xf32, #tpu.memory_space<vmem>>, vector<2x32xf32>,
    %c0_i32_9 = arith.constant 0 : i32
    %19 = arith.cmpi eq, %arg1, %c0_i32_9 : i32
    %20 = arith.extui %19 : i1 to i32
    %c0_i32_10 = arith.constant 0 : i32
    %21 = arith.cmpi ne, %20, %c0_i32_10 : i32
    scf.if %21 {
      %c0_11 = arith.constant 0 : index
      %c0_12 = arith.constant 0 : index
      %22 = vector.load %arg7[%c0_11, %c0_12] : memref<2x32xf32, #tpu.memory_space<vmem>>, vector<2x32xf32>
      %c0_13 = arith.constant 0 : index
      %c0_14 = arith.constant 0 : index
      %23 = vector.load %arg4[%c0_13, %c0_14] : memref<32x128xf32, #tpu.memory_space<vmem>>, vector<32x128xf32>
      %cst_15 = arith.constant dense<0.000000e+00> : vector<2x128xf32>
      %24 = tpu.matmul %22, %23, %cst_15 {dimension_numbers = #tpu.dot_dimension_numbers<[1], [0], [0], [1], [0, 0, 1, 1], [], []>} : vector<2x32xf32>, vector<32x128xf32>, vector<2x128xf32> -> vector<2x128xf32>
      %c0_16 = arith.constant 0 : index
      %c0_17 = arith.constant 0 : index
      %25 = vector.load %arg5[%c0_16, %c0_17] : memref<1x128xf32, #tpu.memory_space<vmem>>, vector<1x128xf32>
      %26 = vector.broadcast %25 : vector<1x128xf32> to vector<2x128xf32>
      %27 = arith.addf %24, %26 : vector<2x128xf32>
      %28 = arith.negf %27 : vector<2x128xf32>
      %29 = math.exp %28 : vector<2x128xf32>
      %cst_18 = arith.constant 1.000000e+00 : f32
      %30 = vector.broadcast %cst_18 : f32 to vector<2x128xf32>
      %31 = arith.addf %30, %29 : vector<2x128xf32>
      %32 = arith.divf %30, %31 : vector<2x128xf32>
      %c0_19 = arith.constant 0 : index
      %c0_20 = arith.constant 0 : index
      %33 = vector.load %arg6[%c0_19, %c0_20] : memref<2x128xf32, #tpu.memory_space<vmem>>, vector<2x128xf32>
      tpu.vector_store %arg6[%c0_19, %c0_20], %32 {strides = array<i32>} : memref<2x128xf32, #tpu.memory_space<vmem>>, vector<2x128xf32>,
    } else {
    }
    return
  }
  func.func @transform_0(%arg0: i32, %arg1: i32) -> (i32, i32) {
    %c0_i32 = arith.constant 0 : i32
    return %arg0, %arg1 : i32, i32
  }
  func.func @transform_1(%arg0: i32, %arg1: i32) -> (i32, i32) {
    %c0_i32 = arith.constant 0 : i32
    %c0_i32_0 = arith.constant 0 : i32
    %c0_i32_1 = arith.constant 0 : i32
    return %c0_i32, %c0_i32_0 : i32, i32
  }
  func.func @transform_2(%arg0: i32, %arg1: i32) -> (i32, i32) {
    %c0_i32 = arith.constant 0 : i32
    %c0_i32_0 = arith.constant 0 : i32
    %c0_i32_1 = arith.constant 0 : i32
    return %c0_i32, %c0_i32_0 : i32, i32
  }
  func.func @transform_3(%arg0: i32, %arg1: i32) -> (i32, i32) {
    %c0_i32 = arith.constant 0 : i32
    %c0_i32_0 = arith.constant 0 : i32
    %c0_i32_1 = arith.constant 0 : i32
    return %c0_i32, %c0_i32_0 : i32, i32
  }
  func.func @transform_4(%arg0: i32, %arg1: i32) -> (i32, i32) {
    %c0_i32 = arith.constant 0 : i32
    %c0_i32_0 = arith.constant 0 : i32
    return %arg0, %c0_i32 : i32, i32
  }
}

</mosaic_0001>

<llo_original>
// kernel: tpu_custom_call.1
$region0: #{tpu_custom_call.1}
  #allocation0 [shape = 'u32[]', space=smem, size = 0x4, offset = 0x4, fixed_abs, tag = 'smem constant byte address 0x4 - core index']
  #allocation1 [shape = 'u32[72,128]{1,0:T(1,128)}', space=vmem, size = 0x9000, scoped, tag = 'internal scratch']
  #allocation2 [shape = 'f32[2,32]{1,0:T(2,128)}', space=vmem, size = 0x400, scoped, tag = 'scratch operand']
  %s0 = inlined_call_operand.hbm [shape: s32[2,8], index: 0, kind: input, shape index: {}]
  %s1 = inlined_call_operand.hbm [shape: bf16[32,32], index: 1, kind: input, shape index: {}]
  %s2 = inlined_call_operand.hbm [shape: f32[32,128], index: 2, kind: input, shape index: {}]
  %s3 = inlined_call_operand.vmem [shape: f32[1,128], index: 3, kind: input, shape index: {}]
  %s4 = inlined_call_operand.hbm [shape: f32[2,128], index: 4, kind: output, shape index: {}]
  %s5 = sld [smem:[#allocation0]]
  $region46: #{tpu_custom_call.1} parent=0
    _
  %s7 = ssub.s32 1, %s5
  %s8 = scalar_select 0, %s7, %s5
  $region1: #{tpu_custom_call.1} parent=0
    #allocation3 [shape = 'u8[1024]{0}', space=vmem, size = 0x400, scoped, tag = 'input window, operand 0, single buffered']
    #allocation4 [shape = 's32[1]{0}', space=sflag, size = 0x4, scoped, tag = 'scoped memory for tpu_custom_call.1']
    #allocation5 [shape = 's32[1]{0}', space=sflag, size = 0x4, scoped, tag = 'scoped memory for tpu_custom_call.1']
    #allocation6 [shape = 'u8[8192]{0}', space=vmem, size = 0x2000, scoped, tag = 'input window, operand 1, single buffered']
    #allocation7 [shape = 's32[1]{0}', space=sflag, size = 0x4, scoped, tag = 'scoped memory for tpu_custom_call.1']
    #allocation8 [shape = 'u8[16384]{0}', space=vmem, size = 0x4000, scoped, tag = 'input window, operand 2, single buffered']
    #allocation9 [shape = 'u8[1024]{0}', space=vmem, size = 0x400, scoped, tag = 'output window, operand 0, single buffered']
    %9 = vsyncpa [#allocation4], 0
    %10 = vsyncpa [#allocation7], 0
    %11 = vsyncpa [#allocation5], 0
    // Predicated region
    $region2: #{tpu_custom_call.1} parent=1 // pred_check
      _
    $region3: #{tpu_custom_call.1} parent=1 // pred_check_branch
      %13 = sbr.rel (0) target = $region5
    $region4: #{tpu_custom_call.1} parent=1 // pred_region
      %15 = vsyncadd [#allocation4], 0
      %s17 = sshll.u32 %s0, 4
      %s18 = int_to_ptr.hbm [resolvable:$true] %s17
      %s19 = sshll.u32 [#allocation3], 4
      %s20 = int_to_ptr.vmem [resolvable:$true] %s19
      %22 = dma.hbm_to_vmem [thread:$0]  %s18, 32, %s20, [#allocation4]
    $region5: #{tpu_custom_call.1} parent=1 // pred_fallthru
      _
    // Predicated region
    $region6: #{tpu_custom_call.1} parent=1 // pred_check
      _
    $region7: #{tpu_custom_call.1} parent=1 // pred_check_branch
      %24 = sbr.rel (0) target = $region9
    $region8: #{tpu_custom_call.1} parent=1 // pred_region
      %26 = vsyncadd [#allocation7], 0
      %s27 = sshll.u32 %s1, 4
      %s28 = int_to_ptr.hbm [resolvable:$true] %s27
      %s29 = sshll.u32 [#allocation6], 4
      %s30 = int_to_ptr.vmem [resolvable:$true] %s29
      %35 = dma.hbm_to_vmem [thread:$0]  %s28, 256, %s30, [#allocation7], 64, 64, 4
    $region9: #{tpu_custom_call.1} parent=1 // pred_fallthru
      _
    // Predicated region
    $region10: #{tpu_custom_call.1} parent=1 // pred_check
      _
    $region11: #{tpu_custom_call.1} parent=1 // pred_check_branch
      %37 = sbr.rel (0) target = $region13
    $region12: #{tpu_custom_call.1} parent=1 // pred_region
      %39 = vsyncadd [#allocation7], 0
      %s40 = sshll.u32 %s2, 4
      %s41 = int_to_ptr.hbm [resolvable:$true] %s40
      %s42 = sshll.u32 [#allocation8], 4
      %s43 = int_to_ptr.vmem [resolvable:$true] %s42
      %48 = dma.hbm_to_vmem [thread:$0]  %s41, 512, %s43, [#allocation7], 128, 128, 8
    $region13: #{tpu_custom_call.1} parent=1 // pred_fallthru
      _
    // Predicated region
    $region14: #{tpu_custom_call.1} parent=1 // pred_check
      _
    $region15: #{tpu_custom_call.1} parent=1 // pred_check_branch
      %50 = sbr.rel (0) target = $region17
    $region16: #{tpu_custom_call.1} parent=1 // pred_region
      _
    $region17: #{tpu_custom_call.1} parent=1 // pred_fallthru
      _
    // Predicated region
    $region18: #{tpu_custom_call.1} parent=1 // pred_check
      _
    $region19: #{tpu_custom_call.1} parent=1 // pred_check_branch
      %52 = sbr.rel (0) target = $region21
    $region20: #{tpu_custom_call.1} parent=1 // pred_region
      %54 = dma.done [#allocation4], 32
    $region21: #{tpu_custom_call.1} parent=1 // pred_fallthru
      _
    // Predicated region
    $region22: #{tpu_custom_call.1} parent=1 // pred_check
      _
    $region23: #{tpu_custom_call.1} parent=1 // pred_check_branch
      %56 = sbr.rel (0) target = $region25
    $region24: #{tpu_custom_call.1} parent=1 // pred_region
      %58 = dma.done [#allocation7], 256
    $region25: #{tpu_custom_call.1} parent=1 // pred_fallthru
      _
    // Predicated region
    $region26: #{tpu_custom_call.1} parent=1 // pred_check
      _
    $region27: #{tpu_custom_call.1} parent=1 // pred_check_branch
      %60 = sbr.rel (0) target = $region29
    $region28: #{tpu_custom_call.1} parent=1 // pred_region
      %62 = dma.done [#allocation7], 512
    $region29: #{tpu_custom_call.1} parent=1 // pred_fallthru
      _
    %p64 = scmp.eq.s32.totalorder 0, 0
    // Predicated region
    $region30: #{tpu_custom_call.1} parent=1 // pred_check
      %p65 = pneg %p64
    $region31: #{tpu_custom_call.1} parent=1 // pred_check_branch
      %67 = sbr.rel (%p65) target = $region33
    $region32: #{tpu_custom_call.1} parent=1 // pred_region
      %vm68 = vcmask 254976
      %69 = vst.msk [vmem:[#allocation2] sm:$0x3] %vm68, -inf
    $region33: #{tpu_custom_call.1} parent=1 // pred_fallthru
      _
    %v70 = vld [vmem:[#allocation3] sm:$0x3]
    %v71 = vlaneseq
    %v72 = vand.u32 %v71, 127
    %v73 = vperm.slane %v70, 0
    %v74 = vlaneseq
    %v75 = vshrl.u32 %v74, 7
    %77 = vset.pattern.permute.xlu0 %v75
    %78 = vperm.xlu0 %77, %v73
    %v79 = vpop.permute.xlu0 %78
    %v80 = vperm.slane %v70, 1
    %v81 = vlaneseq
    %v82 = vshrl.u32 %v81, 7
    %84 = vset.pattern.permute.xlu0 %v82
    %85 = vperm.xlu0 %84, %v80
    %v86 = vpop.permute.xlu0 %85
    %vm87 = vcmp.eq.s32.totalorder %v79, %v72
    %vm88 = vcmp.eq.s32.totalorder %v86, %v72
    %v89 = vsel %vm87, 1, 0
    %v90 = vsel %vm88, 1, 0
    %v91 = vcvt.s32.f32 %v89
    %v92 = vcvt.s32.f32 %v90
    %v93 = vpack.c.bf16 %v91, %v91
    %v94 = vpack.c.bf16 %v92, %v92
    %v95 = vld [vmem:[#allocation6] sm:$0xf]
    %v96 = vld [vmem:[#allocation6 + $0x4] sm:$0xf]
    %v97 = vld [vmem:[#allocation6 + $0x8] sm:$0xf]
    %v98 = vld [vmem:[#allocation6 + $0xc] sm:$0xf]
    %v101 = vunpack.c.l.b16 %v93
    %v102 = vunpack.c.l.b16 %v94
    %v103 = vpack.c.b16 %v102, %v101
    %v108 = vunpack.c.l.b16 %v95
    %v109 = vunpack.c.l.b16 %v96
    %v110 = vunpack.c.l.b16 %v97
    %v111 = vunpack.c.l.b16 %v98
    %v112 = vpack.c.b16 %v109, %v108
    %v113 = vpack.c.b16 %v111, %v110
    %vm116 = vcmask 261120
    %v118 = vsel %vm116, %v103, 0
    %120 = vmatpush.bf16.msra.mxu0 0
    %121 = vmatpush.bf16.msra.mxu0 0
    %122 = vmatpush.bf16.msra.mxu0 0
    %123 = vmatpush.bf16.msra.mxu0 0
    %124 = vmatpush.bf16.msra.mxu0 0
    %125 = vmatpush.bf16.msra.mxu0 0
    %126 = vmatpush.bf16.msra.mxu0 %v113
    %127 = vmatpush.bf16.msra.mxu0 %v112
    %128 = vmatmul.bf16.gmra.mxu0 %v118
    %v129 = vpop.f32.mrf.mxu0
    %v130 = vadd.f32 0.0, %v129
    %v131 = vpop.f32.mrf.mxu0
    %v132 = vadd.f32 0.0, %v131
    %133 = vdwg.mxu0
    %v134 = vld [vmem:[#allocation2] sm:$0x3]
    %v135 = vsel %vm116, %v130, -inf
    %v136 = vrot.slane %v135, 4
    %v137 = vmax.f32 %v135, %v136
    %v138 = vrot.slane %v137, 2
    %v139 = vmax.f32 %v137, %v138
    %v140 = vrot.slane %v139, 1
    %v141 = vmax.f32 %v139, %v140
    %v142 = vsel %vm116, %v132, -inf
    %v143 = vrot.slane %v142, 4
    %v144 = vmax.f32 %v142, %v143
    %v145 = vrot.slane %v144, 2
    %v146 = vmax.f32 %v144, %v145
    %v147 = vrot.slane %v146, 1
    %v148 = vmax.f32 %v146, %v147
    %vm151 = vcmask 1041409
    %v152 = vsel %vm151, %v148, %v141
    %v154 = vmax.f32 %v134, %v152
    %vm155 = vcmask 254976
    %156 = vst.msk [vmem:[#allocation2] sm:$0x3] %vm155, %v154
    // Predicated region
    $region34: #{tpu_custom_call.1} parent=1 // pred_check
      %p157 = pneg %p64
    $region35: #{tpu_custom_call.1} parent=1 // pred_check_branch
      %159 = sbr.rel (%p157) target = $region37
    $region36: #{tpu_custom_call.1} parent=1 // pred_region
      %v160 = vld [vmem:[#allocation2] sm:$0x3]
      %v161 = vld [vmem:[#allocation8] sm:$0xff]
      %v162 = vld [vmem:[#allocation8 + $0x8] sm:$0xff]
      %v163 = vld [vmem:[#allocation8 + $0x10] sm:$0xff]
      %v164 = vld [vmem:[#allocation8 + $0x18] sm:$0xff]
      %v165 = vld [vmem:[%s3] sm:$0x1]
      %v167 = vperm.slane %v165, 0
      %v170 = vsel %vm116, %v160, 0
      %172 = vmatpush.msra.mxu0 0.0
      %173 = vmatpush.msra.mxu0 0.0
      %174 = vmatpush.msra.mxu0 0.0
      %175 = vmatpush.msra.mxu0 0.0
      %176 = vmatpush.msra.mxu0 0.0
      %177 = vmatpush.msra.mxu0 0.0
      %178 = vmatpush.msra.mxu0 0.0
      %179 = vmatpush.msra.mxu0 0.0
      %180 = vmatpush.msra.mxu0 0.0
      %181 = vmatpush.msra.mxu0 0.0
      %182 = vmatpush.msra.mxu0 0.0
      %183 = vmatpush.msra.mxu0 0.0
      %184 = vmatpush.msra.mxu0 %v164
      %185 = vmatpush.msra.mxu0 %v163
      %186 = vmatpush.msra.mxu0 %v162
      %187 = vmatpush.msra.mxu0 %v161
      %188 = vmatmul.f32.gmra.mxu0 %v170
      %v189 = vpop.f32.mrf.mxu0
      %v190 = vadd.f32 %v167, %v189
      %191 = vdwg.mxu0
      %v192 = vxor.u32 %v190, 2147483648
      %v193 = vmul.f32 %v192, 1.442695
      %v194 = vpow.pop %v193
      %v195 = vadd.f32 %v194, 1.0
      %v196 = vrcp.pop %v195
      %v197 = vmul.f32 %v195, %v196
      %v198 = vsub.f32 1.0, %v197
      %v199 = vmul.f32 %v196, %v198
      %v200 = vadd.f32 %v196, %v199
      %vm201 = vweird.f32 %v195
      %vm202 = vweird.f32 %v196
      %vm203 = vmor %vm201, %vm202
      %v204 = vsel %vm203, %v196, %v200
      %v205 = vand.u32 2147483647, %v195
      %vm206 = vcmp.eq.f32.partialorder %v205, 8.507059e+37
      %v207 = vand.u32 %v195, 2147483648
      %v208 = vor.u32 1.1754944e-38, %v207
      %v209 = vsel %vm206, %v208, %v204
      %v210 = vmul.f32 1.0, %v209
      %211 = vst [vmem:[#allocation9] sm:$0x3] %v210
    $region37: #{tpu_custom_call.1} parent=1 // pred_fallthru
      _
    // Predicated region
    $region38: #{tpu_custom_call.1} parent=1 // pred_check
      _
    $region39: #{tpu_custom_call.1} parent=1 // pred_check_branch
      %213 = sbr.rel (0) target = $region41
    $region40: #{tpu_custom_call.1} parent=1 // pred_region
      %215 = vsyncadd [#allocation5], 0
      %s217 = sshll.u32 [#allocation9], 4
      %s218 = int_to_ptr.vmem [resolvable:$true] %s217
      %s219 = sshll.u32 %s4, 4
      %s220 = int_to_ptr.hbm [resolvable:$true] %s219
      %222 = dma.vmem_to_hbm [thread:$0]  %s218, 32, %s220, [#allocation5]
    $region41: #{tpu_custom_call.1} parent=1 // pred_fallthru
      _
    // Predicated region
    $region42: #{tpu_custom_call.1} parent=1 // pred_check
      _
    $region43: #{tpu_custom_call.1} parent=1 // pred_check_branch
      %224 = sbr.rel (0) target = $region45
    $region44: #{tpu_custom_call.1} parent=1 // pred_region
      %226 = dma.done [#allocation5], 32
    $region45: #{tpu_custom_call.1} parent=1 // pred_fallthru
      _
    %227 = vsyncpa [#allocation4], 1
    %228 = vsyncpa [#allocation7], 1
    %229 = vsyncpa [#allocation5], 1

</llo_original>
